<compile_context>
chip_gen: v6e
topology: v6e:2x2x1
jax: 0.10.0
libtpu: 0.0.40
codegen_flags: <defaults>
</compile_context>

<pallas_src>
import numpy as np
import jax
import jax.numpy as jnp
from jax.experimental import pallas as pl
from jax.experimental.pallas import tpu as pltpu

# ---- model hyper-parameters (consistent with the PyTorch module) ----
d_model = 32
d_q = d_k = d_v = 8
n_heads = 4
d_ff = 64
SEQ = 8
BATCH = 2
LN_EPS = 1e-5            # torch.nn.LayerNorm default

HS = n_heads * SEQ       # 32 : expanded (head, key) axis per batch
HD = n_heads * d_v       # 32 : concatenated head channels
NQ = n_heads * d_q
NK = n_heads * d_k
NV = n_heads * d_v
BS = BATCH * SEQ         # 16 : flattened (batch, query) rows
BHS = BATCH * HS         # 64 : flattened (batch, head, key) columns

# ---- packed weight slab layout (32 rows x 256 cols, zero waste) ----
W_COLS   = 256
OFF_WQKV = 0      # (32, 96)  [W_Q | W_K | W_V]
OFF_WO   = 96     # (32, 32)
OFF_W1   = 128    # (32, 64)
OFF_W2T  = 192    # (32, 64)  == W2.T (FFN2 contracts last dims, no transpose)

# ---- packed constant slab layout (64 rows x 128 cols) ----
C_COLS  = 128
OFF_R   = 0       # (64, 16)  0/1 replication matrix: row m <- k/v row of (batch,key)
OFF_HM  = 16      # (64, 32)  0/1 head-channel selector
OFF_SEG = 48      # (64, 64)  0/1 per-head segment-sum matrix (softmax denominator)

# ---- packed bias / LayerNorm slab layout (rows) ----
B_ROWS, B_COLS = 8, 96
(ROW_BQKV, ROW_BO, ROW_LN1G, ROW_LN1B,
 ROW_B1, ROW_B2, ROW_LN2G, ROW_LN2B) = range(8)


def _layernorm(v, g, b):
    mu = jnp.mean(v, axis=-1, keepdims=True)
    var = jnp.mean((v - mu) ** 2, axis=-1, keepdims=True)
    return (v - mu) * jax.lax.rsqrt(var + LN_EPS) * g + b


def encoder_layer_kernel(x_ref, neg_ref, w_ref, c_ref, b_ref, out_ref, attn_ref):
    x2 = x_ref[...]                                            # (16, 32)

    bias = b_ref[...]                                          # (8, 96)
    bqkv = bias[ROW_BQKV:ROW_BQKV + 1, :NQ + NK + NV]          # (1, 96)
    bo   = bias[ROW_BO:ROW_BO + 1, :d_model]
    ln1g = bias[ROW_LN1G:ROW_LN1G + 1, :d_model]
    ln1b = bias[ROW_LN1B:ROW_LN1B + 1, :d_model]
    b1   = bias[ROW_B1:ROW_B1 + 1, :d_ff]
    b2   = bias[ROW_B2:ROW_B2 + 1, :d_model]
    ln2g = bias[ROW_LN2G:ROW_LN2G + 1, :d_model]
    ln2b = bias[ROW_LN2B:ROW_LN2B + 1, :d_model]

    # ---- fused QKV projection: one MXU pass ----
    wqkv = w_ref[:, OFF_WQKV:OFF_WQKV + NQ + NK + NV]          # (32, 96)
    qkv = jnp.dot(x2, wqkv, preferred_element_type=jnp.float32) + bqkv
    q2 = qkv[:, 0:NQ]                                          # (16, 32)
    k2 = qkv[:, NQ:NQ + NK]
    v2 = qkv[:, NQ + NK:NQ + NK + NV]

    consts = c_ref[...]                                        # (64, 128)
    rep   = consts[:, OFF_R:OFF_R + BS]                        # (64, 16)  0/1
    hmask = consts[:, OFF_HM:OFF_HM + HD]                      # (64, 32)  0/1
    seg   = consts[:, OFF_SEG:OFF_SEG + BHS]                   # (64, 64)  0/1

    # ---- head/batch expansion on the MXU (no sublane/lane concats) ----
    kexp = jnp.dot(rep, k2, preferred_element_type=jnp.float32) * hmask   # (64, 32)
    vexp = jnp.dot(rep, v2, preferred_element_type=jnp.float32) * hmask   # (64, 32)

    # ---- all (batch, head) scores in one 2-D matmul ----
    scale = jnp.float32(1.0 / np.sqrt(d_k))
    scores = jax.lax.dot_general(q2, kexp, (((1,), (1,)), ((), ())),
                                 preferred_element_type=jnp.float32)
    scores = scores * scale + neg_ref[...]                     # (16, 64)

    # per-(batch,head) softmax; denominator via MXU segment-sum (kept in f32)
    m = jnp.max(scores, axis=-1, keepdims=True)
    e = jnp.exp(scores - m)
    denom = jnp.dot(e, seg, preferred_element_type=jnp.float32)
    denom = jnp.maximum(denom, jnp.float32(1e-30))             # guard 0/0 underflow
    attn2 = e * pl.reciprocal(denom, approx=True)              # EUP, not VALU divide
    attn_ref[...] = attn2                                      # (16, 64) lane-dense

    # ---- context directly in (B*S, n_heads*d_v) layout ----
    ctx = jnp.dot(attn2, vexp, preferred_element_type=jnp.float32)        # (16, 32)

    # ---- output projection + residual + LayerNorm ----
    wo = w_ref[:, OFF_WO:OFF_WO + d_model]
    proj = jnp.dot(ctx, wo, preferred_element_type=jnp.float32) + bo
    y1 = _layernorm(proj + x2, ln1g, ln1b)

    # ---- position-wise FFN (conv1d k=1 == matmul) + residual + LayerNorm ----
    w1 = w_ref[:, OFF_W1:OFF_W1 + d_ff]
    h = jnp.maximum(jnp.dot(y1, w1, preferred_element_type=jnp.float32) + b1, 0.0)
    w2t = w_ref[:, OFF_W2T:OFF_W2T + d_ff]                     # (32, 64) == W2.T
    ffn = jax.lax.dot_general(h, w2t, (((1,), (1,)), ((), ())),
                              preferred_element_type=jnp.float32) + b2
    out_ref[...] = _layernorm(ffn + y1, ln2g, ln2b)            # (16, 32)


def pack_params(params):
    """Build the packed slabs ONCE at param-init time (pure numpy, host side)."""
    (wq, bq, wk, bk, wv, bv, wo, bo, ln1g, ln1b,
     w1, b1, w2, b2, ln2g, ln2b) = [np.asarray(p, np.float32) for p in params]

    w_slab = np.zeros((d_model, W_COLS), np.float32)
    w_slab[:, OFF_WQKV:OFF_WQKV + NQ + NK + NV] = np.concatenate([wq, wk, wv], axis=1)
    w_slab[:, OFF_WO:OFF_WO + d_model] = wo
    w_slab[:, OFF_W1:OFF_W1 + d_ff] = w1
    w_slab[:, OFF_W2T:OFF_W2T + d_ff] = w2.T

    # constant selector matrices (0/1), baked once
    m = np.arange(BHS)
    head = (m // SEQ) % n_heads                 # head id of expanded row m
    src_row = (m // HS) * SEQ + (m % SEQ)       # (batch,key) row of k2/v2 feeding row m
    rep = (src_row[:, None] == np.arange(BS)[None, :]).astype(np.float32)      # (64,16)
    hmask = (head[:, None] == (np.arange(HD) // d_v)[None, :]).astype(np.float32)  # (64,32)
    seg = (head[:, None] == head[None, :]).astype(np.float32)                  # (64,64)

    c_slab = np.zeros((BHS, C_COLS), np.float32)
    c_slab[:, OFF_R:OFF_R + BS] = rep
    c_slab[:, OFF_HM:OFF_HM + HD] = hmask
    c_slab[:, OFF_SEG:OFF_SEG + BHS] = seg

    b_slab = np.zeros((B_ROWS, B_COLS), np.float32)
    b_slab[ROW_BQKV, 0:NQ + NK + NV] = np.concatenate([bq, bk, bv])
    b_slab[ROW_BO, 0:d_model] = bo
    b_slab[ROW_LN1G, 0:d_model] = ln1g
    b_slab[ROW_LN1B, 0:d_model] = ln1b
    b_slab[ROW_B1, 0:d_ff] = b1
    b_slab[ROW_B2, 0:d_model] = b2
    b_slab[ROW_LN2G, 0:d_model] = ln2g
    b_slab[ROW_LN2B, 0:d_model] = ln2b
    return jnp.asarray(w_slab), jnp.asarray(c_slab), jnp.asarray(b_slab)


def encoder_layer(x, mask_f, w_slab, c_slab, b_slab):
    """Jit this whole function: mask tiling + pallas_call + attn layout fix = 1 dispatch."""
    B, S, D = x.shape
    x2 = x.reshape(B * S, D)                                   # free row-major reshape

    # pre-tiled additive mask, block-diagonal across batch: (B*S, B*HS)
    add = jnp.where(mask_f > 0.5, jnp.float32(-1e9), jnp.float32(0.0))   # (B,S,S)
    add_h = jnp.tile(add, (1, 1, n_heads))                               # (B,S,HS)
    eye_b = jnp.eye(B, dtype=jnp.bool_)
    neg2 = jnp.where(eye_b[:, None, :, None], add_h[:, :, None, :],
                     jnp.float32(-1e9)).reshape(B * S, B * HS)

    grid_spec = pltpu.PrefetchScalarGridSpec(
        num_scalar_prefetch=0,
        grid=(1,),                                             # single invocation
        in_specs=[
            pl.BlockSpec((BS, d_model), lambda i: (0, 0)),     # x (flattened)
            pl.BlockSpec((BS, BHS), lambda i: (0, 0)),         # pre-tiled additive mask
            pl.BlockSpec((d_model, W_COLS), lambda i: (0, 0)), # packed weights
            pl.BlockSpec((BHS, C_COLS), lambda i: (0, 0)),     # packed 0/1 constants
            pl.BlockSpec((B_ROWS, B_COLS), lambda i: (0, 0)),  # packed biases / LN params
        ],
        out_specs=[
            pl.BlockSpec((BS, d_model), lambda i: (0, 0)),     # enc_outputs (flattened)
            pl.BlockSpec((BS, BHS), lambda i: (0, 0)),         # attention (flattened)
        ],
    )
    out_shape = [
        jax.ShapeDtypeStruct((BS, d_model), jnp.float32),
        jax.ShapeDtypeStruct((BS, BHS), jnp.float32),
    ]
    fn = pl.pallas_call(
        encoder_layer_kernel,
        out_shape=out_shape,
        grid_spec=grid_spec,
        compiler_params=pltpu.CompilerParams(
            dimension_semantics=("arbitrary",)),
    )
    out2, attn_full = fn(x2, neg2, w_slab, c_slab, b_slab)

    out = out2.reshape(B, S, D)
    # restore the module's attention layout (B, n_heads, S, S); same-batch blocks only
    attn5 = attn_full.reshape(B, S, B, n_heads, S)
    idx = jnp.arange(B)
    attn = jnp.transpose(attn5[idx, :, idx], (0, 2, 1, 3))
    return out, attn


def make_params(key):
    ks = jax.random.split(key, 12)
    sc = 0.05
    wq = sc * jax.random.normal(ks[0], (d_model, NQ), jnp.float32)
    bq = sc * jax.random.normal(ks[1], (NQ,), jnp.float32)
    wk = sc * jax.random.normal(ks[2], (d_model, NK), jnp.float32)
    bk = sc * jax.random.normal(ks[3], (NK,), jnp.float32)
    wv = sc * jax.random.normal(ks[4], (d_model, NV), jnp.float32)
    bv = sc * jax.random.normal(ks[5], (NV,), jnp.float32)
    wo = sc * jax.random.normal(ks[6], (NV, d_model), jnp.float32)
    bo = sc * jax.random.normal(ks[7], (d_model,), jnp.float32)
    ln1g = jnp.ones((d_model,), jnp.float32)
    ln1b = jnp.zeros((d_model,), jnp.float32)
    w1 = sc * jax.random.normal(ks[8], (d_model, d_ff), jnp.float32)
    b1 = sc * jax.random.normal(ks[9], (d_ff,), jnp.float32)
    w2 = sc * jax.random.normal(ks[10], (d_ff, d_model), jnp.float32)
    b2 = sc * jax.random.normal(ks[11], (d_model,), jnp.float32)
    ln2g = jnp.ones((d_model,), jnp.float32)
    ln2b = jnp.zeros((d_model,), jnp.float32)
    return (wq, bq, wk, bk, wv, bv, wo, bo, ln1g, ln1b,
            w1, b1, w2, b2, ln2g, ln2b)


def reference(x, mask_f, params):
    (wq, bq, wk, bk, wv, bv, wo, bo, ln1g, ln1b,
     w1, b1, w2, b2, ln2g, ln2b) = params
    B, S, D = x.shape
    q = (x @ wq + bq).reshape(B, S, n_heads, d_q).transpose(0, 2, 1, 3)
    k = (x @ wk + bk).reshape(B, S, n_heads, d_k).transpose(0, 2, 1, 3)
    v = (x @ wv + bv).reshape(B, S, n_heads, d_v).transpose(0, 2, 1, 3)
    scores = jnp.einsum("bhqd,bhkd->bhqk", q, k) / np.sqrt(d_k)
    scores = jnp.where(mask_f[:, None] > 0.5, -1e9, scores)
    attn = jax.nn.softmax(scores, axis=-1)
    ctx = jnp.einsum("bhqk,bhkd->bhqd", attn, v)
    ctx = ctx.transpose(0, 2, 1, 3).reshape(B, S, n_heads * d_v)
    o = ctx @ wo + bo
    y1 = _layernorm(o + x, ln1g, ln1b)
    h = jnp.maximum(y1 @ w1 + b1, 0.0)
    f = h @ w2 + b2
    y2 = _layernorm(f + y1, ln2g, ln2b)
    return y2, attn


if __name__ == "__main__":
    key = jax.random.PRNGKey(0)
    k_x, k_m, k_p = jax.random.split(key, 3)

    x = jax.random.normal(k_x, (BATCH, SEQ, d_model), jnp.float32)
    # deterministic padding-style mask (last two key positions masked)
    mask_bool = jnp.zeros((BATCH, SEQ, SEQ), jnp.bool_).at[:, :, SEQ - 2:].set(True)
    mask_f = mask_bool.astype(jnp.float32)

    params = make_params(k_p)
    w_slab, c_slab, b_slab = pack_params(params)    # packed ONCE at init time

    fwd = jax.jit(encoder_layer)                    # one dispatch per call
    out, attn = fwd(x, mask_f, w_slab, c_slab, b_slab)
    out = jax.block_until_ready(out)
    attn = jax.block_until_ready(attn)

    with jax.default_matmul_precision("highest"):
        ref_out, ref_attn = reference(x, mask_f, params)

    # 1e-3 leaves margin for the EUP approximate reciprocal (~2^-12 rel) and
    # MXU/VPU rounding-order differences; typical observed error is ~1e-5.
    assert np.allclose(np.asarray(out), np.asarray(ref_out), atol=1e-3), "enc_outputs mismatch"
    assert np.allclose(np.asarray(attn), np.asarray(ref_attn), atol=1e-3), "attn mismatch"

    print("KERNEL_OK")
</pallas_src>

<mosaic_0001>
module attributes {stable_mosaic.version = 11 : i64} {
  func.func @encoder_layer_kernel(%arg0: i32, %arg1: memref<16x32xf32, #tpu.memory_space<vmem>>, %arg2: memref<16x64xf32, #tpu.memory_space<vmem>>, %arg3: memref<32x256xf32, #tpu.memory_space<vmem>>, %arg4: memref<64x128xf32, #tpu.memory_space<vmem>>, %arg5: memref<8x96xf32, #tpu.memory_space<vmem>>, %arg6: memref<16x32xf32, #tpu.memory_space<vmem>>, %arg7: memref<16x64xf32, #tpu.memory_space<vmem>>) attributes {dimension_semantics = [#tpu.dimension_semantics<arbitrary>], iteration_bounds = array<i64: 1>, scalar_prefetch = 0 : i64, scratch_operands = 0 : i64, tpu.core_type = #tpu.core_type<tc>, window_params = [{pipeline_mode = #tpu.pipeline_mode<synchronous>, transform_indices = @transform_0, window_bounds = array<i64: 16, 32>}, {pipeline_mode = #tpu.pipeline_mode<synchronous>, transform_indices = @transform_1, window_bounds = array<i64: 16, 64>}, {pipeline_mode = #tpu.pipeline_mode<synchronous>, transform_indices = @transform_2, window_bounds = array<i64: 32, 256>}, {pipeline_mode = #tpu.pipeline_mode<synchronous>, transform_indices = @transform_3, window_bounds = array<i64: 64, 128>}, {pipeline_mode = #tpu.pipeline_mode<synchronous>, transform_indices = @transform_4, window_bounds = array<i64: 8, 96>}, {pipeline_mode = #tpu.pipeline_mode<synchronous>, transform_indices = @transform_5, window_bounds = array<i64: 16, 32>}, {pipeline_mode = #tpu.pipeline_mode<synchronous>, transform_indices = @transform_6, window_bounds = array<i64: 16, 64>}]} {
    %c0 = arith.constant 0 : index
    %c0_0 = arith.constant 0 : index
    %0 = vector.load %arg1[%c0, %c0_0] : memref<16x32xf32, #tpu.memory_space<vmem>>, vector<16x32xf32>
    %c0_1 = arith.constant 0 : index
    %c0_2 = arith.constant 0 : index
    %1 = vector.load %arg5[%c0_1, %c0_2] : memref<8x96xf32, #tpu.memory_space<vmem>>, vector<8x96xf32>
    %2 = vector.extract_strided_slice %1 {offsets = [0, 0], sizes = [1, 96], strides = [1, 1]} : vector<8x96xf32> to vector<1x96xf32>
    %3 = vector.extract_strided_slice %1 {offsets = [1, 0], sizes = [1, 32], strides = [1, 1]} : vector<8x96xf32> to vector<1x32xf32>
    %4 = vector.extract_strided_slice %1 {offsets = [2, 0], sizes = [1, 32], strides = [1, 1]} : vector<8x96xf32> to vector<1x32xf32>
    %5 = vector.extract_strided_slice %1 {offsets = [3, 0], sizes = [1, 32], strides = [1, 1]} : vector<8x96xf32> to vector<1x32xf32>
    %6 = vector.extract_strided_slice %1 {offsets = [4, 0], sizes = [1, 64], strides = [1, 1]} : vector<8x96xf32> to vector<1x64xf32>
    %7 = vector.extract_strided_slice %1 {offsets = [5, 0], sizes = [1, 32], strides = [1, 1]} : vector<8x96xf32> to vector<1x32xf32>
    %8 = vector.extract_strided_slice %1 {offsets = [6, 0], sizes = [1, 32], strides = [1, 1]} : vector<8x96xf32> to vector<1x32xf32>
    %9 = vector.extract_strided_slice %1 {offsets = [7, 0], sizes = [1, 32], strides = [1, 1]} : vector<8x96xf32> to vector<1x32xf32>
    %c0_3 = arith.constant 0 : index
    %c0_4 = arith.constant 0 : index
    %10 = vector.load %arg3[%c0_3, %c0_4] : memref<32x256xf32, #tpu.memory_space<vmem>>, vector<32x96xf32>
    %cst = arith.constant dense<0.000000e+00> : vector<16x96xf32>
    %11 = tpu.matmul %0, %10, %cst {dimension_numbers = #tpu.dot_dimension_numbers<[1], [0], [0], [1], [0, 0, 1, 1], [], []>} : vector<16x32xf32>, vector<32x96xf32>, vector<16x96xf32> -> vector<16x96xf32>
    %12 = vector.broadcast %2 : vector<1x96xf32> to vector<16x96xf32>
    %13 = arith.addf %11, %12 : vector<16x96xf32>
    %14 = vector.extract_strided_slice %13 {offsets = [0, 0], sizes = [16, 32], strides = [1, 1]} : vector<16x96xf32> to vector<16x32xf32>
    %15 = vector.extract_strided_slice %13 {offsets = [0, 32], sizes = [16, 32], strides = [1, 1]} : vector<16x96xf32> to vector<16x32xf32>
    %16 = vector.extract_strided_slice %13 {offsets = [0, 64], sizes = [16, 32], strides = [1, 1]} : vector<16x96xf32> to vector<16x32xf32>
    %c0_5 = arith.constant 0 : index
    %c0_6 = arith.constant 0 : index
    %17 = vector.load %arg4[%c0_5, %c0_6] : memref<64x128xf32, #tpu.memory_space<vmem>>, vector<64x128xf32>
    %18 = vector.extract_strided_slice %17 {offsets = [0, 0], sizes = [64, 16], strides = [1, 1]} : vector<64x128xf32> to vector<64x16xf32>
    %19 = vector.extract_strided_slice %17 {offsets = [0, 16], sizes = [64, 32], strides = [1, 1]} : vector<64x128xf32> to vector<64x32xf32>
    %20 = vector.extract_strided_slice %17 {offsets = [0, 48], sizes = [64, 64], strides = [1, 1]} : vector<64x128xf32> to vector<64x64xf32>
    %cst_7 = arith.constant dense<0.000000e+00> : vector<64x32xf32>
    %21 = tpu.matmul %18, %15, %cst_7 {dimension_numbers = #tpu.dot_dimension_numbers<[1], [0], [0], [1], [0, 0, 1, 1], [], []>} : vector<64x16xf32>, vector<16x32xf32>, vector<64x32xf32> -> vector<64x32xf32>
    %22 = arith.mulf %21, %19 : vector<64x32xf32>
    %cst_8 = arith.constant dense<0.000000e+00> : vector<64x32xf32>
    %23 = tpu.matmul %18, %16, %cst_8 {dimension_numbers = #tpu.dot_dimension_numbers<[1], [0], [0], [1], [0, 0, 1, 1], [], []>} : vector<64x16xf32>, vector<16x32xf32>, vector<64x32xf32> -> vector<64x32xf32>
    %24 = arith.mulf %23, %19 : vector<64x32xf32>
    %cst_9 = arith.constant dense<0.000000e+00> : vector<16x64xf32>
    %25 = tpu.matmul %14, %22, %cst_9 {dimension_numbers = #tpu.dot_dimension_numbers<[1], [1], [0], [0], [0, 0, 1, 0], [], []>} : vector<16x32xf32>, vector<64x32xf32>, vector<16x64xf32> -> vector<16x64xf32>
    %cst_10 = arith.constant 0.353553385 : f32
    %26 = vector.broadcast %cst_10 : f32 to vector<16x64xf32>
    %27 = arith.mulf %25, %26 : vector<16x64xf32>
    %c0_11 = arith.constant 0 : index
    %c0_12 = arith.constant 0 : index
    %28 = vector.load %arg2[%c0_11, %c0_12] : memref<16x64xf32, #tpu.memory_space<vmem>>, vector<16x64xf32>
    %29 = arith.addf %27, %28 : vector<16x64xf32>
    %cst_13 = arith.constant dense<0xFF800000> : vector<16xf32>
    %30 = vector.multi_reduction <maximumf>, %29, %cst_13 [1] : vector<16x64xf32> to vector<16xf32>
    %31 = vector.shape_cast %30 : vector<16xf32> to vector<16x1xf32>
    %32 = vector.broadcast %31 : vector<16x1xf32> to vector<16x64xf32>
    %33 = arith.subf %29, %32 : vector<16x64xf32>
    %34 = math.exp %33 : vector<16x64xf32>
    %cst_14 = arith.constant dense<0.000000e+00> : vector<16x64xf32>
    %35 = tpu.matmul %34, %20, %cst_14 {dimension_numbers = #tpu.dot_dimension_numbers<[1], [0], [0], [1], [0, 0, 1, 1], [], []>} : vector<16x64xf32>, vector<64x64xf32>, vector<16x64xf32> -> vector<16x64xf32>
    %cst_15 = arith.constant 1.000000e-30 : f32
    %36 = vector.broadcast %cst_15 : f32 to vector<16x64xf32>
    %37 = arith.maximumf %35, %36 : vector<16x64xf32>
    %38 = tpu.reciprocal %37 {approx = true} : vector<16x64xf32> -> vector<16x64xf32>
    %39 = arith.mulf %34, %38 : vector<16x64xf32>
    %c0_16 = arith.constant 0 : index
    %c0_17 = arith.constant 0 : index
    %40 = vector.load %arg7[%c0_16, %c0_17] : memref<16x64xf32, #tpu.memory_space<vmem>>, vector<16x64xf32>
    tpu.vector_store %arg7[%c0_16, %c0_17], %39 {strides = array<i32>} : memref<16x64xf32, #tpu.memory_space<vmem>>, vector<16x64xf32>,
    %cst_18 = arith.constant dense<0.000000e+00> : vector<16x32xf32>
    %41 = tpu.matmul %39, %24, %cst_18 {dimension_numbers = #tpu.dot_dimension_numbers<[1], [0], [0], [1], [0, 0, 1, 1], [], []>} : vector<16x64xf32>, vector<64x32xf32>, vector<16x32xf32> -> vector<16x32xf32>
    %c0_19 = arith.constant 0 : index
    %c96 = arith.constant 96 : index
    %42 = vector.load %arg3[%c0_19, %c96] : memref<32x256xf32, #tpu.memory_space<vmem>>, vector<32x32xf32>
    %cst_20 = arith.constant dense<0.000000e+00> : vector<16x32xf32>
    %43 = tpu.matmul %41, %42, %cst_20 {dimension_numbers = #tpu.dot_dimension_numbers<[1], [0], [0], [1], [0, 0, 1, 1], [], []>} : vector<16x32xf32>, vector<32x32xf32>, vector<16x32xf32> -> vector<16x32xf32>
    %44 = vector.broadcast %3 : vector<1x32xf32> to vector<16x32xf32>
    %45 = arith.addf %43, %44 : vector<16x32xf32>
    %46 = arith.addf %45, %0 : vector<16x32xf32>
    %cst_21 = arith.constant dense<0.000000e+00> : vector<16xf32>
    %47 = vector.multi_reduction <add>, %46, %cst_21 [1] : vector<16x32xf32> to vector<16xf32>
    %48 = vector.shape_cast %47 : vector<16xf32> to vector<16x1xf32>
    %cst_22 = arith.constant 3.200000e+01 : f32
    %49 = vector.broadcast %cst_22 : f32 to vector<16x1xf32>
    %50 = arith.divf %48, %49 : vector<16x1xf32>
    %51 = vector.broadcast %50 : vector<16x1xf32> to vector<16x32xf32>
    %52 = arith.subf %46, %51 : vector<16x32xf32>
    %53 = arith.mulf %52, %52 : vector<16x32xf32>
    %cst_23 = arith.constant dense<0.000000e+00> : vector<16xf32>
    %54 = vector.multi_reduction <add>, %53, %cst_23 [1] : vector<16x32xf32> to vector<16xf32>
    %55 = vector.shape_cast %54 : vector<16xf32> to vector<16x1xf32>
    %cst_24 = arith.constant 3.200000e+01 : f32
    %56 = vector.broadcast %cst_24 : f32 to vector<16x1xf32>
    %57 = arith.divf %55, %56 : vector<16x1xf32>
    %58 = vector.broadcast %50 : vector<16x1xf32> to vector<16x32xf32>
    %59 = arith.subf %46, %58 : vector<16x32xf32>
    %cst_25 = arith.constant 9.99999974E-6 : f32
    %60 = vector.broadcast %cst_25 : f32 to vector<16x1xf32>
    %61 = arith.addf %57, %60 : vector<16x1xf32>
    %62 = math.rsqrt %61 : vector<16x1xf32>
    %63 = vector.broadcast %62 : vector<16x1xf32> to vector<16x32xf32>
    %64 = arith.mulf %59, %63 : vector<16x32xf32>
    %65 = vector.broadcast %4 : vector<1x32xf32> to vector<16x32xf32>
    %66 = arith.mulf %64, %65 : vector<16x32xf32>
    %67 = vector.broadcast %5 : vector<1x32xf32> to vector<16x32xf32>
    %68 = arith.addf %66, %67 : vector<16x32xf32>
    %c0_26 = arith.constant 0 : index
    %c128 = arith.constant 128 : index
    %69 = vector.load %arg3[%c0_26, %c128] : memref<32x256xf32, #tpu.memory_space<vmem>>, vector<32x64xf32>
    %cst_27 = arith.constant dense<0.000000e+00> : vector<16x64xf32>
    %70 = tpu.matmul %68, %69, %cst_27 {dimension_numbers = #tpu.dot_dimension_numbers<[1], [0], [0], [1], [0, 0, 1, 1], [], []>} : vector<16x32xf32>, vector<32x64xf32>, vector<16x64xf32> -> vector<16x64xf32>
    %71 = vector.broadcast %6 : vector<1x64xf32> to vector<16x64xf32>
    %72 = arith.addf %70, %71 : vector<16x64xf32>
    %cst_28 = arith.constant 0.000000e+00 : f32
    %73 = vector.broadcast %cst_28 : f32 to vector<16x64xf32>
    %74 = arith.maximumf %72, %73 : vector<16x64xf32>
    %c0_29 = arith.constant 0 : index
    %c192 = arith.constant 192 : index
    %75 = vector.load %arg3[%c0_29, %c192] : memref<32x256xf32, #tpu.memory_space<vmem>>, vector<32x64xf32>
    %cst_30 = arith.constant dense<0.000000e+00> : vector<16x32xf32>
    %76 = tpu.matmul %74, %75, %cst_30 {dimension_numbers = #tpu.dot_dimension_numbers<[1], [1], [0], [0], [0, 0, 1, 0], [], []>} : vector<16x64xf32>, vector<32x64xf32>, vector<16x32xf32> -> vector<16x32xf32>
    %77 = vector.broadcast %7 : vector<1x32xf32> to vector<16x32xf32>
    %78 = arith.addf %76, %77 : vector<16x32xf32>
    %79 = arith.addf %78, %68 : vector<16x32xf32>
    %cst_31 = arith.constant dense<0.000000e+00> : vector<16xf32>
    %80 = vector.multi_reduction <add>, %79, %cst_31 [1] : vector<16x32xf32> to vector<16xf32>
    %81 = vector.shape_cast %80 : vector<16xf32> to vector<16x1xf32>
    %cst_32 = arith.constant 3.200000e+01 : f32
    %82 = vector.broadcast %cst_32 : f32 to vector<16x1xf32>
    %83 = arith.divf %81, %82 : vector<16x1xf32>
    %84 = vector.broadcast %83 : vector<16x1xf32> to vector<16x32xf32>
    %85 = arith.subf %79, %84 : vector<16x32xf32>
    %86 = arith.mulf %85, %85 : vector<16x32xf32>
    %cst_33 = arith.constant dense<0.000000e+00> : vector<16xf32>
    %87 = vector.multi_reduction <add>, %86, %cst_33 [1] : vector<16x32xf32> to vector<16xf32>
    %88 = vector.shape_cast %87 : vector<16xf32> to vector<16x1xf32>
    %cst_34 = arith.constant 3.200000e+01 : f32
    %89 = vector.broadcast %cst_34 : f32 to vector<16x1xf32>
    %90 = arith.divf %88, %89 : vector<16x1xf32>
    %91 = vector.broadcast %83 : vector<16x1xf32> to vector<16x32xf32>
    %92 = arith.subf %79, %91 : vector<16x32xf32>
    %cst_35 = arith.constant 9.99999974E-6 : f32
    %93 = vector.broadcast %cst_35 : f32 to vector<16x1xf32>
    %94 = arith.addf %90, %93 : vector<16x1xf32>
    %95 = math.rsqrt %94 : vector<16x1xf32>
    %96 = vector.broadcast %95 : vector<16x1xf32> to vector<16x32xf32>
    %97 = arith.mulf %92, %96 : vector<16x32xf32>
    %98 = vector.broadcast %8 : vector<1x32xf32> to vector<16x32xf32>
    %99 = arith.mulf %97, %98 : vector<16x32xf32>
    %100 = vector.broadcast %9 : vector<1x32xf32> to vector<16x32xf32>
    %101 = arith.addf %99, %100 : vector<16x32xf32>
    %c0_36 = arith.constant 0 : index
    %c0_37 = arith.constant 0 : index
    %102 = vector.load %arg6[%c0_36, %c0_37] : memref<16x32xf32, #tpu.memory_space<vmem>>, vector<16x32xf32>
    tpu.vector_store %arg6[%c0_36, %c0_37], %101 {strides = array<i32>} : memref<16x32xf32, #tpu.memory_space<vmem>>, vector<16x32xf32>,
    return
  }
  func.func @transform_0(%arg0: i32) -> (i32, i32) {
    %c0_i32 = arith.constant 0 : i32
    %c0_i32_0 = arith.constant 0 : i32
    %c0_i32_1 = arith.constant 0 : i32
    return %c0_i32, %c0_i32_0 : i32, i32
  }
  func.func @transform_1(%arg0: i32) -> (i32, i32) {
    %c0_i32 = arith.constant 0 : i32
    %c0_i32_0 = arith.constant 0 : i32
    %c0_i32_1 = arith.constant 0 : i32
    return %c0_i32, %c0_i32_0 : i32, i32
  }
  func.func @transform_2(%arg0: i32) -> (i32, i32) {
    %c0_i32 = arith.constant 0 : i32
    %c0_i32_0 = arith.constant 0 : i32
    %c0_i32_1 = arith.constant 0 : i32
    return %c0_i32, %c0_i32_0 : i32, i32
  }
  func.func @transform_3(%arg0: i32) -> (i32, i32) {
    %c0_i32 = arith.constant 0 : i32
    %c0_i32_0 = arith.constant 0 : i32
    %c0_i32_1 = arith.constant 0 : i32
    return %c0_i32, %c0_i32_0 : i32, i32
  }
  func.func @transform_4(%arg0: i32) -> (i32, i32) {
    %c0_i32 = arith.constant 0 : i32
    %c0_i32_0 = arith.constant 0 : i32
    %c0_i32_1 = arith.constant 0 : i32
    return %c0_i32, %c0_i32_0 : i32, i32
  }
  func.func @transform_5(%arg0: i32) -> (i32, i32) {
    %c0_i32 = arith.constant 0 : i32
    %c0_i32_0 = arith.constant 0 : i32
    %c0_i32_1 = arith.constant 0 : i32
    return %c0_i32, %c0_i32_0 : i32, i32
  }
  func.func @transform_6(%arg0: i32) -> (i32, i32) {
    %c0_i32 = arith.constant 0 : i32
    %c0_i32_0 = arith.constant 0 : i32
    %c0_i32_1 = arith.constant 0 : i32
    return %c0_i32, %c0_i32_0 : i32, i32
  }
}

</mosaic_0001>

<llo_original>
// kernel: encoder_layer.1
$region0: #{encoder_layer.1}
  #allocation0 [shape = 'u32[]', space=smem, size = 0x4, offset = 0x4, fixed_abs, tag = 'smem constant byte address 0x4 - core index']
  #allocation1 [shape = 'u32[144,128]{1,0:T(1,128)}', space=vmem, size = 0x12000, scoped, tag = 'internal scratch']
  %s0 = inlined_call_operand.vmem [shape: f32[16,32], index: 0, kind: input, shape index: {}]
  %s1 = inlined_call_operand.vmem [shape: f32[16,64], index: 1, kind: input, shape index: {}]
  %s2 = inlined_call_operand.vmem [shape: f32[32,256], index: 2, kind: input, shape index: {}]
  %s3 = inlined_call_operand.vmem [shape: f32[64,128], index: 3, kind: input, shape index: {}]
  %s4 = inlined_call_operand.vmem [shape: f32[8,96], index: 4, kind: input, shape index: {}]
  %s5 = inlined_call_operand.hbm [shape: f32[16,32], index: 5, kind: output, shape index: {0}]
  %s6 = inlined_call_operand.vmem [shape: f32[16,64], index: 6, kind: output, shape index: {1}]
  %7 = xla_tuple %s5, %s6
  %s8 = sld [smem:[#allocation0]]
  $region38: #{encoder_layer.1} parent=0
    _
  %s10 = ssub.s32 1, %s8
  %s11 = scalar_select 0, %s10, %s8
  $region1: #{encoder_layer.1} parent=0
    #allocation2 [shape = 'u8[8192]{0}', space=vmem, size = 0x2000, scoped, tag = 'output window, operand 0, single buffered']
    #allocation3 [shape = 's32[1]{0}', space=sflag, size = 0x4, scoped, tag = 'scoped memory for encoder_layer.1']
    %12 = vsyncpa [#allocation3], 0
    // Predicated region
    $region2: #{encoder_layer.1} parent=1 // pred_check
      _
    $region3: #{encoder_layer.1} parent=1 // pred_check_branch
      %14 = sbr.rel (0) target = $region5
    $region4: #{encoder_layer.1} parent=1 // pred_region
      _
    $region5: #{encoder_layer.1} parent=1 // pred_fallthru
      _
    // Predicated region
    $region6: #{encoder_layer.1} parent=1 // pred_check
      _
    $region7: #{encoder_layer.1} parent=1 // pred_check_branch
      %16 = sbr.rel (0) target = $region9
    $region8: #{encoder_layer.1} parent=1 // pred_region
      _
    $region9: #{encoder_layer.1} parent=1 // pred_fallthru
      _
    // Predicated region
    $region10: #{encoder_layer.1} parent=1 // pred_check
      _
    $region11: #{encoder_layer.1} parent=1 // pred_check_branch
      %18 = sbr.rel (0) target = $region13
    $region12: #{encoder_layer.1} parent=1 // pred_region
      _
    $region13: #{encoder_layer.1} parent=1 // pred_fallthru
      _
    // Predicated region
    $region14: #{encoder_layer.1} parent=1 // pred_check
      _
    $region15: #{encoder_layer.1} parent=1 // pred_check_branch
      %20 = sbr.rel (0) target = $region17
    $region16: #{encoder_layer.1} parent=1 // pred_region
      _
    $region17: #{encoder_layer.1} parent=1 // pred_fallthru
      _
    // Predicated region
    $region18: #{encoder_layer.1} parent=1 // pred_check
      _
    $region19: #{encoder_layer.1} parent=1 // pred_check_branch
      %22 = sbr.rel (0) target = $region21
    $region20: #{encoder_layer.1} parent=1 // pred_region
      _
    $region21: #{encoder_layer.1} parent=1 // pred_fallthru
      _
    %v23 = vld [vmem:[%s0] sm:$0xff]
    %v24 = vld [vmem:[%s0 + $0x8] sm:$0xff]
    %v25 = vld [vmem:[%s4] sm:$0xff]
    %v26 = vld [vmem:[%s2] sm:$0xff]
    %v27 = vld [vmem:[%s2 + $0x10] sm:$0xff]
    %v28 = vld [vmem:[%s2 + $0x20] sm:$0xff]
    %v29 = vld [vmem:[%s2 + $0x30] sm:$0xff]
    %v30 = vlaneseq
    %v31 = vshrl.u32 %v30, 7
    %v32 = vsub.s32 0, %v31
    %v33 = vrot.slane %v25, %v32
    %vm34 = vcmask 261120
    %v36 = vsel %vm34, %v23, 0
    %v39 = vsel %vm34, %v24, 0
    %41 = vmatprep.subr.mxu0 0.0
    %42 = vmatpush1.msra.mxu0 0.0
    %43 = vmatprep.subr.mxu0 0.0
    %44 = vmatpush1.msra.mxu0 0.0
    %45 = vmatprep.subr.mxu0 0.0
    %46 = vmatpush1.msra.mxu0 0.0
    %47 = vmatprep.subr.mxu0 0.0
    %48 = vmatpush1.msra.mxu0 0.0
    %49 = vmatprep.subr.mxu0 0.0
    %50 = vmatpush1.msra.mxu0 0.0
    %51 = vmatprep.subr.mxu0 0.0
    %52 = vmatpush1.msra.mxu0 0.0
    %53 = vmatprep.subr.mxu0 0.0
    %54 = vmatpush1.msra.mxu0 0.0
    %55 = vmatprep.subr.mxu0 0.0
    %56 = vmatpush1.msra.mxu0 0.0
    %57 = vmatprep.subr.mxu0 0.0
    %58 = vmatpush1.msra.mxu0 0.0
    %59 = vmatprep.subr.mxu0 0.0
    %60 = vmatpush1.msra.mxu0 0.0
    %61 = vmatprep.subr.mxu0 0.0
    %62 = vmatpush1.msra.mxu0 0.0
    %63 = vmatprep.subr.mxu0 0.0
    %64 = vmatpush1.msra.mxu0 0.0
    %65 = vmatprep.subr.mxu0 0.0
    %66 = vmatpush1.msra.mxu0 %v29
    %67 = vmatprep.subr.mxu0 0.0
    %68 = vmatpush1.msra.mxu0 %v28
    %69 = vmatprep.subr.mxu0 0.0
    %70 = vmatpush1.msra.mxu0 %v27
    %71 = vmatprep.subr.mxu0 0.0
    %72 = vmatpush1.msra.mxu0 %v26
    %73 = vmatprep.subr.mxu0 0.0
    %74 = vmatpush2.msra.mxu0 0.0
    %75 = vmatprep.subr.mxu0 0.0
    %76 = vmatpush2.msra.mxu0 0.0
    %77 = vmatprep.subr.mxu0 0.0
    %78 = vmatpush2.msra.mxu0 0.0
    %79 = vmatprep.subr.mxu0 0.0
    %80 = vmatpush2.msra.mxu0 0.0
    %81 = vmatprep.subr.mxu0 0.0
    %82 = vmatpush2.msra.mxu0 0.0
    %83 = vmatprep.subr.mxu0 0.0
    %84 = vmatpush2.msra.mxu0 0.0
    %85 = vmatprep.subr.mxu0 0.0
    %86 = vmatpush2.msra.mxu0 0.0
    %87 = vmatprep.subr.mxu0 0.0
    %88 = vmatpush2.msra.mxu0 0.0
    %89 = vmatprep.subr.mxu0 0.0
    %90 = vmatpush2.msra.mxu0 0.0
    %91 = vmatprep.subr.mxu0 0.0
    %92 = vmatpush2.msra.mxu0 0.0
    %93 = vmatprep.subr.mxu0 0.0
    %94 = vmatpush2.msra.mxu0 0.0
    %95 = vmatprep.subr.mxu0 0.0
    %96 = vmatpush2.msra.mxu0 0.0
    %97 = vmatprep.subr.mxu0 0.0
    %98 = vmatpush2.msra.mxu0 0.0
    %99 = vmatprep.subr.mxu0 0.0
    %100 = vmatpush2.msra.mxu0 0.0
    %101 = vmatprep.subr.mxu0 0.0
    %102 = vmatpush2.msra.mxu0 0.0
    %103 = vmatprep.subr.mxu0 0.0
    %104 = vmatpush2.msra.mxu0 0.0
    %105 = vmatprep.mubr.f32.mxu0 0.0
    %106 = vmatmul.mubr.f32.gmra.mxu0 %v36
    %v107 = vpop.f32.mrf.mxu0
    %v108 = vadd.f32 %v33, %v107
    %v109 = vpop.f32.mrf.mxu0
    %110 = vmatprep.mubr.f32.mxu0 0.0
    %111 = vmatmul.mubr.f32.gmra.mxu0 %v39
    %v112 = vpop.f32.mrf.mxu0
    %v113 = vadd.f32 %v33, %v112
    %v114 = vpop.f32.mrf.mxu0
    %115 = vdwg.mxu0
    %v116 = vld [vmem:[%s3] sm:$0xff]
    %v117 = vld [vmem:[%s3 + $0x8] sm:$0xff]
    %v118 = vld [vmem:[%s3 + $0x10] sm:$0xff]
    %v119 = vld [vmem:[%s3 + $0x18] sm:$0xff]
    %v120 = vld [vmem:[%s3 + $0x20] sm:$0xff]
    %v121 = vld [vmem:[%s3 + $0x28] sm:$0xff]
    %v122 = vld [vmem:[%s3 + $0x30] sm:$0xff]
    %v123 = vld [vmem:[%s3 + $0x38] sm:$0xff]
    %126 = vrot.lane.b32.xlu0 %v108, 96
    %v127 = vpop.permute.xlu0 %126
    %128 = vrot.lane.b32.xlu0 %v113, 96
    %v129 = vpop.permute.xlu0 %128
    %vm132 = vcmask 130048
    %v134 = vsel %vm132, %v116, 0
    %v137 = vsel %vm132, %v117, 0
    %v140 = vsel %vm132, %v118, 0
    %v143 = vsel %vm132, %v119, 0
    %v146 = vsel %vm132, %v120, 0
    %v149 = vsel %vm132, %v121, 0
    %v152 = vsel %vm132, %v122, 0
    %v155 = vsel %vm132, %v123, 0
    %157 = vmatprep.subr.mxu0 0.0
    %158 = vmatpush1.msra.mxu0 0.0
    %159 = vmatprep.subr.mxu0 0.0
    %160 = vmatpush1.msra.mxu0 0.0
    %161 = vmatprep.subr.mxu0 0.0
    %162 = vmatpush1.msra.mxu0 0.0
    %163 = vmatprep.subr.mxu0 0.0
    %164 = vmatpush1.msra.mxu0 0.0
    %165 = vmatprep.subr.mxu0 0.0
    %166 = vmatpush1.msra.mxu0 0.0
    %167 = vmatprep.subr.mxu0 0.0
    %168 = vmatpush1.msra.mxu0 0.0
    %169 = vmatprep.subr.mxu0 0.0
    %170 = vmatpush1.msra.mxu0 0.0
    %171 = vmatprep.subr.mxu0 0.0
    %172 = vmatpush1.msra.mxu0 0.0
    %173 = vmatprep.subr.mxu0 0.0
    %174 = vmatpush1.msra.mxu0 0.0
    %175 = vmatprep.subr.mxu0 0.0
    %176 = vmatpush1.msra.mxu0 0.0
    %177 = vmatprep.subr.mxu0 0.0
    %178 = vmatpush1.msra.mxu0 0.0
    %179 = vmatprep.subr.mxu0 0.0
    %180 = vmatpush1.msra.mxu0 0.0
    %181 = vmatprep.subr.mxu0 0.0
    %182 = vmatpush1.msra.mxu0 0.0
    %183 = vmatprep.subr.mxu0 0.0
    %184 = vmatpush1.msra.mxu0 0.0
    %185 = vmatprep.subr.mxu0 0.0
    %186 = vmatpush1.msra.mxu0 %v129
    %187 = vmatprep.subr.mxu0 0.0
    %188 = vmatpush1.msra.mxu0 %v127
    %189 = vmatprep.subr.mxu0 0.0
    %190 = vmatpush2.msra.mxu0 0.0
    %191 = vmatprep.subr.mxu0 0.0
    %192 = vmatpush2.msra.mxu0 0.0
    %193 = vmatprep.subr.mxu0 0.0
    %194 = vmatpush2.msra.mxu0 0.0
    %195 = vmatprep.subr.mxu0 0.0
    %196 = vmatpush2.msra.mxu0 0.0
    %197 = vmatprep.subr.mxu0 0.0
    %198 = vmatpush2.msra.mxu0 0.0
    %199 = vmatprep.subr.mxu0 0.0
    %200 = vmatpush2.msra.mxu0 0.0
    %201 = vmatprep.subr.mxu0 0.0
    %202 = vmatpush2.msra.mxu0 0.0
    %203 = vmatprep.subr.mxu0 0.0
    %204 = vmatpush2.msra.mxu0 0.0
    %205 = vmatprep.subr.mxu0 0.0
    %206 = vmatpush2.msra.mxu0 0.0
    %207 = vmatprep.subr.mxu0 0.0
    %208 = vmatpush2.msra.mxu0 0.0
    %209 = vmatprep.subr.mxu0 0.0
    %210 = vmatpush2.msra.mxu0 0.0
    %211 = vmatprep.subr.mxu0 0.0
    %212 = vmatpush2.msra.mxu0 0.0
    %213 = vmatprep.subr.mxu0 0.0
    %214 = vmatpush2.msra.mxu0 0.0
    %215 = vmatprep.subr.mxu0 0.0
    %216 = vmatpush2.msra.mxu0 0.0
    %217 = vmatprep.subr.mxu0 0.0
    %218 = vmatpush2.msra.mxu0 0.0
    %219 = vmatprep.subr.mxu0 0.0
    %220 = vmatpush2.msra.mxu0 0.0
    %221 = vmatprep.mubr.f32.mxu0 0.0
    %222 = vmatmul.mubr.f32.gmra.mxu0 %v134
    %v223 = vpop.f32.mrf.mxu0
    %v224 = vadd.f32 0.0, %v223
    %v225 = vpop.f32.mrf.mxu0
    %226 = vmatprep.mubr.f32.mxu0 0.0
    %227 = vmatmul.mubr.f32.gmra.mxu0 %v137
    %v228 = vpop.f32.mrf.mxu0
    %v229 = vadd.f32 0.0, %v228
    %v230 = vpop.f32.mrf.mxu0
    %231 = vmatprep.mubr.f32.mxu0 0.0
    %232 = vmatmul.mubr.f32.gmra.mxu0 %v140
    %v233 = vpop.f32.mrf.mxu0
    %v234 = vadd.f32 0.0, %v233
    %v235 = vpop.f32.mrf.mxu0
    %236 = vmatprep.mubr.f32.mxu0 0.0
    %237 = vmatmul.mubr.f32.gmra.mxu0 %v143
    %v238 = vpop.f32.mrf.mxu0
    %v239 = vadd.f32 0.0, %v238
    %v240 = vpop.f32.mrf.mxu0
    %241 = vmatprep.mubr.f32.mxu0 0.0
    %242 = vmatmul.mubr.f32.gmra.mxu0 %v146
    %v243 = vpop.f32.mrf.mxu0
    %v244 = vadd.f32 0.0, %v243
    %v245 = vpop.f32.mrf.mxu0
    %246 = vmatprep.mubr.f32.mxu0 0.0
    %247 = vmatmul.mubr.f32.gmra.mxu0 %v149
    %v248 = vpop.f32.mrf.mxu0
    %v249 = vadd.f32 0.0, %v248
    %v250 = vpop.f32.mrf.mxu0
    %251 = vmatprep.mubr.f32.mxu0 0.0
    %252 = vmatmul.mubr.f32.gmra.mxu0 %v152
    %v253 = vpop.f32.mrf.mxu0
    %v254 = vadd.f32 0.0, %v253
    %v255 = vpop.f32.mrf.mxu0
    %256 = vmatprep.mubr.f32.mxu0 0.0
    %257 = vmatmul.mubr.f32.gmra.mxu0 %v155
    %v258 = vpop.f32.mrf.mxu0
    %v259 = vadd.f32 0.0, %v258
    %v260 = vpop.f32.mrf.mxu0
    %261 = vdwg.mxu0
    %262 = vrot.lane.b32.xlu0 %v116, 112
    %v263 = vpop.permute.xlu0 %262
    %264 = vrot.lane.b32.xlu0 %v117, 112
    %v265 = vpop.permute.xlu0 %264
    %266 = vrot.lane.b32.xlu0 %v118, 112
    %v267 = vpop.permute.xlu0 %266
    %268 = vrot.lane.b32.xlu0 %v119, 112
    %v269 = vpop.permute.xlu0 %268
    %270 = vrot.lane.b32.xlu0 %v120, 112
    %v271 = vpop.permute.xlu0 %270
    %272 = vrot.lane.b32.xlu0 %v121, 112
    %v273 = vpop.permute.xlu0 %272
    %274 = vrot.lane.b32.xlu0 %v122, 112
    %v275 = vpop.permute.xlu0 %274
    %276 = vrot.lane.b32.xlu0 %v123, 112
    %v277 = vpop.permute.xlu0 %276
    %v286 = vmul.f32 %v224, %v263
    %v287 = vmul.f32 %v229, %v265
    %v288 = vmul.f32 %v234, %v267
    %v289 = vmul.f32 %v239, %v269
    %v290 = vmul.f32 %v244, %v271
    %v291 = vmul.f32 %v249, %v273
    %v292 = vmul.f32 %v254, %v275
    %v293 = vmul.f32 %v259, %v277
    %294 = vrot.lane.b32.xlu0 %v108, 64
    %v295 = vpop.permute.xlu0 %294
    %296 = vrot.lane.b32.xlu0 %v113, 64
    %v297 = vpop.permute.xlu0 %296
    %300 = vmatprep.subr.mxu0 0.0
    %301 = vmatpush1.msra.mxu0 0.0
    %302 = vmatprep.subr.mxu0 0.0
    %303 = vmatpush1.msra.mxu0 0.0
    %304 = vmatprep.subr.mxu0 0.0
    %305 = vmatpush1.msra.mxu0 0.0
    %306 = vmatprep.subr.mxu0 0.0
    %307 = vmatpush1.msra.mxu0 0.0
    %308 = vmatprep.subr.mxu0 0.0
    %309 = vmatpush1.msra.mxu0 0.0
    %310 = vmatprep.subr.mxu0 0.0
    %311 = vmatpush1.msra.mxu0 0.0
    %312 = vmatprep.subr.mxu0 0.0
    %313 = vmatpush1.msra.mxu0 0.0
    %314 = vmatprep.subr.mxu0 0.0
    %315 = vmatpush1.msra.mxu0 0.0
    %316 = vmatprep.subr.mxu0 0.0
    %317 = vmatpush1.msra.mxu0 0.0
    %318 = vmatprep.subr.mxu0 0.0
    %319 = vmatpush1.msra.mxu0 0.0
    %320 = vmatprep.subr.mxu0 0.0
    %321 = vmatpush1.msra.mxu0 0.0
    %322 = vmatprep.subr.mxu0 0.0
    %323 = vmatpush1.msra.mxu0 0.0
    %324 = vmatprep.subr.mxu0 0.0
    %325 = vmatpush1.msra.mxu0 0.0
    %326 = vmatprep.subr.mxu0 0.0
    %327 = vmatpush1.msra.mxu0 0.0
    %328 = vmatprep.subr.mxu0 0.0
    %329 = vmatpush1.msra.mxu0 %v297
    %330 = vmatprep.subr.mxu0 0.0
    %331 = vmatpush1.msra.mxu0 %v295
    %332 = vmatprep.subr.mxu0 0.0
    %333 = vmatpush2.msra.mxu0 0.0
    %334 = vmatprep.subr.mxu0 0.0
    %335 = vmatpush2.msra.mxu0 0.0
    %336 = vmatprep.subr.mxu0 0.0
    %337 = vmatpush2.msra.mxu0 0.0
    %338 = vmatprep.subr.mxu0 0.0
    %339 = vmatpush2.msra.mxu0 0.0
    %340 = vmatprep.subr.mxu0 0.0
    %341 = vmatpush2.msra.mxu0 0.0
    %342 = vmatprep.subr.mxu0 0.0
    %343 = vmatpush2.msra.mxu0 0.0
    %344 = vmatprep.subr.mxu0 0.0
    %345 = vmatpush2.msra.mxu0 0.0
    %346 = vmatprep.subr.mxu0 0.0
    %347 = vmatpush2.msra.mxu0 0.0
    %348 = vmatprep.subr.mxu0 0.0
    %349 = vmatpush2.msra.mxu0 0.0
    %350 = vmatprep.subr.mxu0 0.0
    %351 = vmatpush2.msra.mxu0 0.0
    %352 = vmatprep.subr.mxu0 0.0
    %353 = vmatpush2.msra.mxu0 0.0
    %354 = vmatprep.subr.mxu0 0.0
    %355 = vmatpush2.msra.mxu0 0.0
    %356 = vmatprep.subr.mxu0 0.0
    %357 = vmatpush2.msra.mxu0 0.0
    %358 = vmatprep.subr.mxu0 0.0
    %359 = vmatpush2.msra.mxu0 0.0
    %360 = vmatprep.subr.mxu0 0.0
    %361 = vmatpush2.msra.mxu0 0.0
    %362 = vmatprep.subr.mxu0 0.0
    %363 = vmatpush2.msra.mxu0 0.0
    %364 = vmatprep.mubr.f32.mxu0 0.0
    %365 = vmatmul.mubr.f32.gmra.mxu0 %v134
    %v366 = vpop.f32.mrf.mxu0
    %v367 = vadd.f32 0.0, %v366
    %v368 = vpop.f32.mrf.mxu0
    %369 = vmatprep.mubr.f32.mxu0 0.0
    %370 = vmatmul.mubr.f32.gmra.mxu0 %v137
    %v371 = vpop.f32.mrf.mxu0
    %v372 = vadd.f32 0.0, %v371
    %v373 = vpop.f32.mrf.mxu0
    %374 = vmatprep.mubr.f32.mxu0 0.0
    %375 = vmatmul.mubr.f32.gmra.mxu0 %v140
    %v376 = vpop.f32.mrf.mxu0
    %v377 = vadd.f32 0.0, %v376
    %v378 = vpop.f32.mrf.mxu0
    %379 = vmatprep.mubr.f32.mxu0 0.0
    %380 = vmatmul.mubr.f32.gmra.mxu0 %v143
    %v381 = vpop.f32.mrf.mxu0
    %v382 = vadd.f32 0.0, %v381
    %v383 = vpop.f32.mrf.mxu0
    %384 = vmatprep.mubr.f32.mxu0 0.0
    %385 = vmatmul.mubr.f32.gmra.mxu0 %v146
    %v386 = vpop.f32.mrf.mxu0
    %v387 = vadd.f32 0.0, %v386
    %v388 = vpop.f32.mrf.mxu0
    %389 = vmatprep.mubr.f32.mxu0 0.0
    %390 = vmatmul.mubr.f32.gmra.mxu0 %v149
    %v391 = vpop.f32.mrf.mxu0
    %v392 = vadd.f32 0.0, %v391
    %v393 = vpop.f32.mrf.mxu0
    %394 = vmatprep.mubr.f32.mxu0 0.0
    %395 = vmatmul.mubr.f32.gmra.mxu0 %v152
    %v396 = vpop.f32.mrf.mxu0
    %v397 = vadd.f32 0.0, %v396
    %v398 = vpop.f32.mrf.mxu0
    %399 = vmatprep.mubr.f32.mxu0 0.0
    %400 = vmatmul.mubr.f32.gmra.mxu0 %v155
    %v401 = vpop.f32.mrf.mxu0
    %v402 = vadd.f32 0.0, %v401
    %v403 = vpop.f32.mrf.mxu0
    %404 = vdwg.mxu0
    %v405 = vmul.f32 %v367, %v263
    %v406 = vmul.f32 %v372, %v265
    %v407 = vmul.f32 %v377, %v267
    %v408 = vmul.f32 %v382, %v269
    %v409 = vmul.f32 %v387, %v271
    %v410 = vmul.f32 %v392, %v273
    %v411 = vmul.f32 %v397, %v275
    %v412 = vmul.f32 %v402, %v277
    %v413 = vsel %vm34, %v108, 0
    %v415 = vsel %vm34, %v113, 0
    %v418 = vsel %vm34, %v286, 0
    %v421 = vsel %vm34, %v287, 0
    %v424 = vsel %vm34, %v288, 0
    %v427 = vsel %vm34, %v289, 0
    %v430 = vsel %vm34, %v290, 0
    %v433 = vsel %vm34, %v291, 0
    %v436 = vsel %vm34, %v292, 0
    %v439 = vsel %vm34, %v293, 0
    %441 = vmatprep.subr.mxu0 0.0
    %442 = vmatpush1.xpose.msra.mxu0 0.0
    %443 = vmatprep.subr.mxu0 0.0
    %444 = vmatpush1.xpose.msra.mxu0 0.0
    %445 = vmatprep.subr.mxu0 0.0
    %446 = vmatpush1.xpose.msra.mxu0 0.0
    %447 = vmatprep.subr.mxu0 0.0
    %448 = vmatpush1.xpose.msra.mxu0 0.0
    %449 = vmatprep.subr.mxu0 0.0
    %450 = vmatpush1.xpose.msra.mxu0 0.0
    %451 = vmatprep.subr.mxu0 0.0
    %452 = vmatpush1.xpose.msra.mxu0 0.0
    %453 = vmatprep.subr.mxu0 0.0
    %454 = vmatpush1.xpose.msra.mxu0 0.0
    %455 = vmatprep.subr.mxu0 0.0
    %456 = vmatpush1.xpose.msra.mxu0 0.0
    %457 = vmatprep.subr.mxu0 0.0
    %458 = vmatpush1.xpose.msra.mxu0 %v439
    %459 = vmatprep.subr.mxu0 0.0
    %460 = vmatpush1.xpose.msra.mxu0 %v436
    %461 = vmatprep.subr.mxu0 0.0
    %462 = vmatpush1.xpose.msra.mxu0 %v433
    %463 = vmatprep.subr.mxu0 0.0
    %464 = vmatpush1.xpose.msra.mxu0 %v430
    %465 = vmatprep.subr.mxu0 0.0
    %466 = vmatpush1.xpose.msra.mxu0 %v427
    %467 = vmatprep.subr.mxu0 0.0
    %468 = vmatpush1.xpose.msra.mxu0 %v424
    %469 = vmatprep.subr.mxu0 0.0
    %470 = vmatpush1.xpose.msra.mxu0 %v421
    %471 = vmatprep.subr.mxu0 0.0
    %472 = vmatpush1.xpose.msra.mxu0 %v418
    %473 = vmatprep.subr.mxu0 0.0
    %474 = vmatpush2.xpose.msra.mxu0 0.0
    %475 = vmatprep.subr.mxu0 0.0
    %476 = vmatpush2.xpose.msra.mxu0 0.0
    %477 = vmatprep.subr.mxu0 0.0
    %478 = vmatpush2.xpose.msra.mxu0 0.0
    %479 = vmatprep.subr.mxu0 0.0
    %480 = vmatpush2.xpose.msra.mxu0 0.0
    %481 = vmatprep.subr.mxu0 0.0
    %482 = vmatpush2.xpose.msra.mxu0 0.0
    %483 = vmatprep.subr.mxu0 0.0
    %484 = vmatpush2.xpose.msra.mxu0 0.0
    %485 = vmatprep.subr.mxu0 0.0
    %486 = vmatpush2.xpose.msra.mxu0 0.0
    %487 = vmatprep.subr.mxu0 0.0
    %488 = vmatpush2.xpose.msra.mxu0 0.0
    %489 = vmatprep.subr.mxu0 0.0
    %490 = vmatpush2.xpose.msra.mxu0 0.0
    %491 = vmatprep.subr.mxu0 0.0
    %492 = vmatpush2.xpose.msra.mxu0 0.0
    %493 = vmatprep.subr.mxu0 0.0
    %494 = vmatpush2.xpose.msra.mxu0 0.0
    %495 = vmatprep.subr.mxu0 0.0
    %496 = vmatpush2.xpose.msra.mxu0 0.0
    %497 = vmatprep.subr.mxu0 0.0
    %498 = vmatpush2.xpose.msra.mxu0 0.0
    %499 = vmatprep.subr.mxu0 0.0
    %500 = vmatpush2.xpose.msra.mxu0 0.0
    %501 = vmatprep.subr.mxu0 0.0
    %502 = vmatpush2.xpose.msra.mxu0 0.0
    %503 = vmatprep.subr.mxu0 0.0
    %504 = vmatpush2.xpose.msra.mxu0 0.0
    %505 = vmatprep.mubr.f32.mxu0 0.0
    %506 = vmatmul.mubr.f32.gmra.mxu0 %v413
    %v507 = vpop.f32.mrf.mxu0
    %v508 = vadd.f32 0.0, %v507
    %v509 = vpop.f32.mrf.mxu0
    %510 = vmatprep.mubr.f32.mxu0 0.0
    %511 = vmatmul.mubr.f32.gmra.mxu0 %v415
    %v512 = vpop.f32.mrf.mxu0
    %v513 = vadd.f32 0.0, %v512
    %v514 = vpop.f32.mrf.mxu0
    %515 = vdwg.mxu0
    %v516 = vmul.f32 %v508, 0.35355338
    %v517 = vmul.f32 %v513, 0.35355338
    %v518 = vld [vmem:[%s1] sm:$0xff]
    %v519 = vld [vmem:[%s1 + $0x8] sm:$0xff]
    %v520 = vadd.f32 %v516, %v518
    %v521 = vadd.f32 %v517, %v519
    %vm522 = vcmask 523264
    %v523 = vsel %vm522, %v520, -inf
    %524 = vmax.xlane.f32.xlu0 %v523
    %v525 = vpop.xlane.xlu0 %524
    %v526 = vsel %vm522, %v521, -inf
    %527 = vmax.xlane.f32.xlu0 %v526
    %v528 = vpop.xlane.xlu0 %527
    %v529 = vsub.f32 %v520, %v525
    %v530 = vsub.f32 %v521, %v528
    %v531 = vmul.f32 %v529, 1.442695
    %v532 = vpow.pop %v531
    %v533 = vmul.f32 %v530, 1.442695
    %v534 = vpow.pop %v533
    %535 = vrot.lane.b32.xlu0 %v116, 80
    %v536 = vpop.permute.xlu0 %535
    %537 = vrot.lane.b32.xlu0 %v117, 80
    %v538 = vpop.permute.xlu0 %537
    %539 = vrot.lane.b32.xlu0 %v118, 80
    %v540 = vpop.permute.xlu0 %539
    %541 = vrot.lane.b32.xlu0 %v119, 80
    %v542 = vpop.permute.xlu0 %541
    %543 = vrot.lane.b32.xlu0 %v120, 80
    %v544 = vpop.permute.xlu0 %543
    %545 = vrot.lane.b32.xlu0 %v121, 80
    %v546 = vpop.permute.xlu0 %545
    %547 = vrot.lane.b32.xlu0 %v122, 80
    %v548 = vpop.permute.xlu0 %547
    %549 = vrot.lane.b32.xlu0 %v123, 80
    %v550 = vpop.permute.xlu0 %549
    %v560 = vsel %vm522, %v532, 0
    %v563 = vsel %vm522, %v534, 0
    %565 = vmatprep.subr.mxu0 0.0
    %566 = vmatpush1.msra.mxu0 0.0
    %567 = vmatprep.subr.mxu0 0.0
    %568 = vmatpush1.msra.mxu0 0.0
    %569 = vmatprep.subr.mxu0 0.0
    %570 = vmatpush1.msra.mxu0 0.0
    %571 = vmatprep.subr.mxu0 0.0
    %572 = vmatpush1.msra.mxu0 0.0
    %573 = vmatprep.subr.mxu0 0.0
    %574 = vmatpush1.msra.mxu0 0.0
    %575 = vmatprep.subr.mxu0 0.0
    %576 = vmatpush1.msra.mxu0 0.0
    %577 = vmatprep.subr.mxu0 0.0
    %578 = vmatpush1.msra.mxu0 0.0
    %579 = vmatprep.subr.mxu0 0.0
    %580 = vmatpush1.msra.mxu0 0.0
    %581 = vmatprep.subr.mxu0 0.0
    %582 = vmatpush1.msra.mxu0 %v550
    %583 = vmatprep.subr.mxu0 0.0
    %584 = vmatpush1.msra.mxu0 %v548
    %585 = vmatprep.subr.mxu0 0.0
    %586 = vmatpush1.msra.mxu0 %v546
    %587 = vmatprep.subr.mxu0 0.0
    %588 = vmatpush1.msra.mxu0 %v544
    %589 = vmatprep.subr.mxu0 0.0
    %590 = vmatpush1.msra.mxu0 %v542
    %591 = vmatprep.subr.mxu0 0.0
    %592 = vmatpush1.msra.mxu0 %v540
    %593 = vmatprep.subr.mxu0 0.0
    %594 = vmatpush1.msra.mxu0 %v538
    %595 = vmatprep.subr.mxu0 0.0
    %596 = vmatpush1.msra.mxu0 %v536
    %597 = vmatprep.subr.mxu0 0.0
    %598 = vmatpush2.msra.mxu0 0.0
    %599 = vmatprep.subr.mxu0 0.0
    %600 = vmatpush2.msra.mxu0 0.0
    %601 = vmatprep.subr.mxu0 0.0
    %602 = vmatpush2.msra.mxu0 0.0
    %603 = vmatprep.subr.mxu0 0.0
    %604 = vmatpush2.msra.mxu0 0.0
    %605 = vmatprep.subr.mxu0 0.0
    %606 = vmatpush2.msra.mxu0 0.0
    %607 = vmatprep.subr.mxu0 0.0
    %608 = vmatpush2.msra.mxu0 0.0
    %609 = vmatprep.subr.mxu0 0.0
    %610 = vmatpush2.msra.mxu0 0.0
    %611 = vmatprep.subr.mxu0 0.0
    %612 = vmatpush2.msra.mxu0 0.0
    %613 = vmatprep.subr.mxu0 0.0
    %614 = vmatpush2.msra.mxu0 0.0
    %615 = vmatprep.subr.mxu0 0.0
    %616 = vmatpush2.msra.mxu0 0.0
    %617 = vmatprep.subr.mxu0 0.0
    %618 = vmatpush2.msra.mxu0 0.0
    %619 = vmatprep.subr.mxu0 0.0
    %620 = vmatpush2.msra.mxu0 0.0
    %621 = vmatprep.subr.mxu0 0.0
    %622 = vmatpush2.msra.mxu0 0.0
    %623 = vmatprep.subr.mxu0 0.0
    %624 = vmatpush2.msra.mxu0 0.0
    %625 = vmatprep.subr.mxu0 0.0
    %626 = vmatpush2.msra.mxu0 0.0
    %627 = vmatprep.subr.mxu0 0.0
    %628 = vmatpush2.msra.mxu0 0.0
    %629 = vmatprep.mubr.f32.mxu0 0.0
    %630 = vmatmul.mubr.f32.gmra.mxu0 %v560
    %v631 = vpop.f32.mrf.mxu0
    %v632 = vadd.f32 0.0, %v631
    %v633 = vpop.f32.mrf.mxu0
    %634 = vmatprep.mubr.f32.mxu0 0.0
    %635 = vmatmul.mubr.f32.gmra.mxu0 %v563
    %v636 = vpop.f32.mrf.mxu0
    %v637 = vadd.f32 0.0, %v636
    %v638 = vpop.f32.mrf.mxu0
    %639 = vdwg.mxu0
    %v640 = vmax.f32 %v632, 1e-30
    %v641 = vmax.f32 %v637, 1e-30
    %v642 = vrcp.pop %v640
    %v643 = vrcp.pop %v641
    %v644 = vmul.f32 %v532, %v642
    %v645 = vmul.f32 %v534, %v643
    %646 = vst.msk [vmem:[%s6] sm:$0xff] %vm522, %v644
    %647 = vst.msk [vmem:[%s6 + $0x8] sm:$0xff] %vm522, %v645
    %v649 = vsel %vm522, %v644, 0
    %v652 = vsel %vm522, %v645, 0
    %654 = vmatprep.subr.mxu0 0.0
    %655 = vmatpush1.msra.mxu0 0.0
    %656 = vmatprep.subr.mxu0 0.0
    %657 = vmatpush1.msra.mxu0 0.0
    %658 = vmatprep.subr.mxu0 0.0
    %659 = vmatpush1.msra.mxu0 0.0
    %660 = vmatprep.subr.mxu0 0.0
    %661 = vmatpush1.msra.mxu0 0.0
    %662 = vmatprep.subr.mxu0 0.0
    %663 = vmatpush1.msra.mxu0 0.0
    %664 = vmatprep.subr.mxu0 0.0
    %665 = vmatpush1.msra.mxu0 0.0
    %666 = vmatprep.subr.mxu0 0.0
    %667 = vmatpush1.msra.mxu0 0.0
    %668 = vmatprep.subr.mxu0 0.0
    %669 = vmatpush1.msra.mxu0 0.0
    %670 = vmatprep.subr.mxu0 0.0
    %671 = vmatpush1.msra.mxu0 %v412
    %672 = vmatprep.subr.mxu0 0.0
    %673 = vmatpush1.msra.mxu0 %v411
    %674 = vmatprep.subr.mxu0 0.0
    %675 = vmatpush1.msra.mxu0 %v410
    %676 = vmatprep.subr.mxu0 0.0
    %677 = vmatpush1.msra.mxu0 %v409
    %678 = vmatprep.subr.mxu0 0.0
    %679 = vmatpush1.msra.mxu0 %v408
    %680 = vmatprep.subr.mxu0 0.0
    %681 = vmatpush1.msra.mxu0 %v407
    %682 = vmatprep.subr.mxu0 0.0
    %683 = vmatpush1.msra.mxu0 %v406
    %684 = vmatprep.subr.mxu0 0.0
    %685 = vmatpush1.msra.mxu0 %v405
    %686 = vmatprep.subr.mxu0 0.0
    %687 = vmatpush2.msra.mxu0 0.0
    %688 = vmatprep.subr.mxu0 0.0
    %689 = vmatpush2.msra.mxu0 0.0
    %690 = vmatprep.subr.mxu0 0.0
    %691 = vmatpush2.msra.mxu0 0.0
    %692 = vmatprep.subr.mxu0 0.0
    %693 = vmatpush2.msra.mxu0 0.0
    %694 = vmatprep.subr.mxu0 0.0
    %695 = vmatpush2.msra.mxu0 0.0
    %696 = vmatprep.subr.mxu0 0.0
    %697 = vmatpush2.msra.mxu0 0.0
    %698 = vmatprep.subr.mxu0 0.0
    %699 = vmatpush2.msra.mxu0 0.0
    %700 = vmatprep.subr.mxu0 0.0
    %701 = vmatpush2.msra.mxu0 0.0
    %702 = vmatprep.subr.mxu0 0.0
    %703 = vmatpush2.msra.mxu0 0.0
    %704 = vmatprep.subr.mxu0 0.0
    %705 = vmatpush2.msra.mxu0 0.0
    %706 = vmatprep.subr.mxu0 0.0
    %707 = vmatpush2.msra.mxu0 0.0
    %708 = vmatprep.subr.mxu0 0.0
    %709 = vmatpush2.msra.mxu0 0.0
    %710 = vmatprep.subr.mxu0 0.0
    %711 = vmatpush2.msra.mxu0 0.0
    %712 = vmatprep.subr.mxu0 0.0
    %713 = vmatpush2.msra.mxu0 0.0
    %714 = vmatprep.subr.mxu0 0.0
    %715 = vmatpush2.msra.mxu0 0.0
    %716 = vmatprep.subr.mxu0 0.0
    %717 = vmatpush2.msra.mxu0 0.0
    %718 = vmatprep.mubr.f32.mxu0 0.0
    %719 = vmatmul.mubr.f32.gmra.mxu0 %v649
    %v720 = vpop.f32.mrf.mxu0
    %v721 = vadd.f32 0.0, %v720
    %v722 = vpop.f32.mrf.mxu0
    %723 = vmatprep.mubr.f32.mxu0 0.0
    %724 = vmatmul.mubr.f32.gmra.mxu0 %v652
    %v725 = vpop.f32.mrf.mxu0
    %v726 = vadd.f32 0.0, %v725
    %v727 = vpop.f32.mrf.mxu0
    %728 = vdwg.mxu0
    %v729 = vld [vmem:[%s2] sm:$0xff]
    %v730 = vld [vmem:[%s2 + $0x10] sm:$0xff]
    %v731 = vld [vmem:[%s2 + $0x20] sm:$0xff]
    %v732 = vld [vmem:[%s2 + $0x30] sm:$0xff]
    %v733 = vlaneseq
    %v734 = vshrl.u32 %v733, 7
    %v735 = vsub.s32 1, %v734
    %v736 = vrot.slane %v25, %v735
    %741 = vrot.lane.b32.xlu0 %v729, 32
    %v742 = vpop.permute.xlu0 %741
    %743 = vrot.lane.b32.xlu0 %v730, 32
    %v744 = vpop.permute.xlu0 %743
    %745 = vrot.lane.b32.xlu0 %v731, 32
    %v746 = vpop.permute.xlu0 %745
    %747 = vrot.lane.b32.xlu0 %v732, 32
    %v748 = vpop.permute.xlu0 %747
    %v754 = vsel %vm34, %v721, 0
    %v757 = vsel %vm34, %v726, 0
    %759 = vmatprep.subr.mxu0 0.0
    %760 = vmatpush1.msra.mxu0 0.0
    %761 = vmatprep.subr.mxu0 0.0
    %762 = vmatpush1.msra.mxu0 0.0
    %763 = vmatprep.subr.mxu0 0.0
    %764 = vmatpush1.msra.mxu0 0.0
    %765 = vmatprep.subr.mxu0 0.0
    %766 = vmatpush1.msra.mxu0 0.0
    %767 = vmatprep.subr.mxu0 0.0
    %768 = vmatpush1.msra.mxu0 0.0
    %769 = vmatprep.subr.mxu0 0.0
    %770 = vmatpush1.msra.mxu0 0.0
    %771 = vmatprep.subr.mxu0 0.0
    %772 = vmatpush1.msra.mxu0 0.0
    %773 = vmatprep.subr.mxu0 0.0
    %774 = vmatpush1.msra.mxu0 0.0
    %775 = vmatprep.subr.mxu0 0.0
    %776 = vmatpush1.msra.mxu0 0.0
    %777 = vmatprep.subr.mxu0 0.0
    %778 = vmatpush1.msra.mxu0 0.0
    %779 = vmatprep.subr.mxu0 0.0
    %780 = vmatpush1.msra.mxu0 0.0
    %781 = vmatprep.subr.mxu0 0.0
    %782 = vmatpush1.msra.mxu0 0.0
    %783 = vmatprep.subr.mxu0 0.0
    %784 = vmatpush1.msra.mxu0 %v748
    %785 = vmatprep.subr.mxu0 0.0
    %786 = vmatpush1.msra.mxu0 %v746
    %787 = vmatprep.subr.mxu0 0.0
    %788 = vmatpush1.msra.mxu0 %v744
    %789 = vmatprep.subr.mxu0 0.0
    %790 = vmatpush1.msra.mxu0 %v742
    %791 = vmatprep.subr.mxu0 0.0
    %792 = vmatpush2.msra.mxu0 0.0
    %793 = vmatprep.subr.mxu0 0.0
    %794 = vmatpush2.msra.mxu0 0.0
    %795 = vmatprep.subr.mxu0 0.0
    %796 = vmatpush2.msra.mxu0 0.0
    %797 = vmatprep.subr.mxu0 0.0
    %798 = vmatpush2.msra.mxu0 0.0
    %799 = vmatprep.subr.mxu0 0.0
    %800 = vmatpush2.msra.mxu0 0.0
    %801 = vmatprep.subr.mxu0 0.0
    %802 = vmatpush2.msra.mxu0 0.0
    %803 = vmatprep.subr.mxu0 0.0
    %804 = vmatpush2.msra.mxu0 0.0
    %805 = vmatprep.subr.mxu0 0.0
    %806 = vmatpush2.msra.mxu0 0.0
    %807 = vmatprep.subr.mxu0 0.0
    %808 = vmatpush2.msra.mxu0 0.0
    %809 = vmatprep.subr.mxu0 0.0
    %810 = vmatpush2.msra.mxu0 0.0
    %811 = vmatprep.subr.mxu0 0.0
    %812 = vmatpush2.msra.mxu0 0.0
    %813 = vmatprep.subr.mxu0 0.0
    %814 = vmatpush2.msra.mxu0 0.0
    %815 = vmatprep.subr.mxu0 0.0
    %816 = vmatpush2.msra.mxu0 0.0
    %817 = vmatprep.subr.mxu0 0.0
    %818 = vmatpush2.msra.mxu0 0.0
    %819 = vmatprep.subr.mxu0 0.0
    %820 = vmatpush2.msra.mxu0 0.0
    %821 = vmatprep.subr.mxu0 0.0
    %822 = vmatpush2.msra.mxu0 0.0
    %823 = vmatprep.mubr.f32.mxu0 0.0
    %824 = vmatmul.mubr.f32.gmra.mxu0 %v754
    %v825 = vpop.f32.mrf.mxu0
    %v826 = vadd.f32 %v736, %v825
    %v827 = vpop.f32.mrf.mxu0
    %828 = vmatprep.mubr.f32.mxu0 0.0
    %829 = vmatmul.mubr.f32.gmra.mxu0 %v757
    %v830 = vpop.f32.mrf.mxu0
    %v831 = vadd.f32 %v736, %v830
    %v832 = vpop.f32.mrf.mxu0
    %833 = vdwg.mxu0
    %v834 = vadd.f32 %v826, %v23
    %v835 = vadd.f32 %v831, %v24
    %v836 = vsel %vm34, %v834, 0.0
    %837 = vadd.xlane.f32.xlu0 %v836
    %v838 = vpop.xlane.xlu0 %837
    %v839 = vsel %vm34, %v835, 0.0
    %840 = vadd.xlane.f32.xlu0 %v839
    %v841 = vpop.xlane.xlu0 %840
    %v842 = vrcp.pop 32.0
    %v843 = vmul.f32 %v838, %v842
    %v844 = vmul.f32 %v841, %v842
    %v845 = vsub.f32 %v834, %v843
    %v846 = vsub.f32 %v835, %v844
    %v847 = vmul.f32 %v845, %v845
    %v848 = vmul.f32 %v846, %v846
    %v849 = vsel %vm34, %v847, 0.0
    %850 = vadd.xlane.f32.xlu0 %v849
    %v851 = vpop.xlane.xlu0 %850
    %v852 = vsel %vm34, %v848, 0.0
    %853 = vadd.xlane.f32.xlu0 %v852
    %v854 = vpop.xlane.xlu0 %853
    %v855 = vmul.f32 %v851, %v842
    %v856 = vmul.f32 %v854, %v842
    %v857 = vadd.f32 %v855, 1e-05
    %v858 = vadd.f32 %v856, 1e-05
    %v859 = vrsqrt.pop %v857
    %v860 = vrsqrt.pop %v858
    %v861 = vmul.f32 %v845, %v859
    %v862 = vmul.f32 %v846, %v860
    %v863 = vlaneseq
    %v864 = vshrl.u32 %v863, 7
    %v865 = vsub.s32 2, %v864
    %v866 = vrot.slane %v25, %v865
    %v867 = vmul.f32 %v861, %v866
    %v868 = vmul.f32 %v862, %v866
    %v869 = vlaneseq
    %v870 = vshrl.u32 %v869, 7
    %v871 = vsub.s32 3, %v870
    %v872 = vrot.slane %v25, %v871
    %v873 = vadd.f32 %v867, %v872
    %v874 = vadd.f32 %v868, %v872
    %v875 = vld [vmem:[%s2 + $0x8] sm:$0xff]
    %v876 = vld [vmem:[%s2 + $0x18] sm:$0xff]
    %v877 = vld [vmem:[%s2 + $0x28] sm:$0xff]
    %v878 = vld [vmem:[%s2 + $0x38] sm:$0xff]
    %v879 = vlaneseq
    %v880 = vshrl.u32 %v879, 7
    %v881 = vsub.s32 4, %v880
    %v882 = vrot.slane %v25, %v881
    %v884 = vsel %vm34, %v873, 0
    %v887 = vsel %vm34, %v874, 0
    %889 = vmatprep.subr.mxu0 0.0
    %890 = vmatpush1.msra.mxu0 0.0
    %891 = vmatprep.subr.mxu0 0.0
    %892 = vmatpush1.msra.mxu0 0.0
    %893 = vmatprep.subr.mxu0 0.0
    %894 = vmatpush1.msra.mxu0 0.0
    %895 = vmatprep.subr.mxu0 0.0
    %896 = vmatpush1.msra.mxu0 0.0
    %897 = vmatprep.subr.mxu0 0.0
    %898 = vmatpush1.msra.mxu0 0.0
    %899 = vmatprep.subr.mxu0 0.0
    %900 = vmatpush1.msra.mxu0 0.0
    %901 = vmatprep.subr.mxu0 0.0
    %902 = vmatpush1.msra.mxu0 0.0
    %903 = vmatprep.subr.mxu0 0.0
    %904 = vmatpush1.msra.mxu0 0.0
    %905 = vmatprep.subr.mxu0 0.0
    %906 = vmatpush1.msra.mxu0 0.0
    %907 = vmatprep.subr.mxu0 0.0
    %908 = vmatpush1.msra.mxu0 0.0
    %909 = vmatprep.subr.mxu0 0.0
    %910 = vmatpush1.msra.mxu0 0.0
    %911 = vmatprep.subr.mxu0 0.0
    %912 = vmatpush1.msra.mxu0 0.0
    %913 = vmatprep.subr.mxu0 0.0
    %914 = vmatpush1.msra.mxu0 %v878
    %915 = vmatprep.subr.mxu0 0.0
    %916 = vmatpush1.msra.mxu0 %v877
    %917 = vmatprep.subr.mxu0 0.0
    %918 = vmatpush1.msra.mxu0 %v876
    %919 = vmatprep.subr.mxu0 0.0
    %920 = vmatpush1.msra.mxu0 %v875
    %921 = vmatprep.subr.mxu0 0.0
    %922 = vmatpush2.msra.mxu0 0.0
    %923 = vmatprep.subr.mxu0 0.0
    %924 = vmatpush2.msra.mxu0 0.0
    %925 = vmatprep.subr.mxu0 0.0
    %926 = vmatpush2.msra.mxu0 0.0
    %927 = vmatprep.subr.mxu0 0.0
    %928 = vmatpush2.msra.mxu0 0.0
    %929 = vmatprep.subr.mxu0 0.0
    %930 = vmatpush2.msra.mxu0 0.0
    %931 = vmatprep.subr.mxu0 0.0
    %932 = vmatpush2.msra.mxu0 0.0
    %933 = vmatprep.subr.mxu0 0.0
    %934 = vmatpush2.msra.mxu0 0.0
    %935 = vmatprep.subr.mxu0 0.0
    %936 = vmatpush2.msra.mxu0 0.0
    %937 = vmatprep.subr.mxu0 0.0
    %938 = vmatpush2.msra.mxu0 0.0
    %939 = vmatprep.subr.mxu0 0.0
    %940 = vmatpush2.msra.mxu0 0.0
    %941 = vmatprep.subr.mxu0 0.0
    %942 = vmatpush2.msra.mxu0 0.0
    %943 = vmatprep.subr.mxu0 0.0
    %944 = vmatpush2.msra.mxu0 0.0
    %945 = vmatprep.subr.mxu0 0.0
    %946 = vmatpush2.msra.mxu0 0.0
    %947 = vmatprep.subr.mxu0 0.0
    %948 = vmatpush2.msra.mxu0 0.0
    %949 = vmatprep.subr.mxu0 0.0
    %950 = vmatpush2.msra.mxu0 0.0
    %951 = vmatprep.subr.mxu0 0.0
    %952 = vmatpush2.msra.mxu0 0.0
    %953 = vmatprep.mubr.f32.mxu0 0.0
    %954 = vmatmul.mubr.f32.gmra.mxu0 %v884
    %v955 = vpop.f32.mrf.mxu0
    %v956 = vadd.f32 %v882, %v955
    %v957 = vpop.f32.mrf.mxu0
    %958 = vmatprep.mubr.f32.mxu0 0.0
    %959 = vmatmul.mubr.f32.gmra.mxu0 %v887
    %v960 = vpop.f32.mrf.mxu0
    %v961 = vadd.f32 %v882, %v960
    %v962 = vpop.f32.mrf.mxu0
    %963 = vdwg.mxu0
    %v964 = vmax.f32 %v956, 0.0
    %v965 = vmax.f32 %v961, 0.0
    %v966 = vlaneseq
    %v967 = vshrl.u32 %v966, 7
    %v968 = vsub.s32 5, %v967
    %v969 = vrot.slane %v25, %v968
    %974 = vrot.lane.b32.xlu0 %v875, 64
    %v975 = vpop.permute.xlu0 %974
    %976 = vrot.lane.b32.xlu0 %v876, 64
    %v977 = vpop.permute.xlu0 %976
    %978 = vrot.lane.b32.xlu0 %v877, 64
    %v979 = vpop.permute.xlu0 %978
    %980 = vrot.lane.b32.xlu0 %v878, 64
    %v981 = vpop.permute.xlu0 %980
    %v983 = vsel %vm522, %v964, 0
    %v986 = vsel %vm522, %v965, 0
    %v988 = vsel %vm522, %v975, 0
    %v990 = vsel %vm522, %v977, 0
    %v992 = vsel %vm522, %v979, 0
    %v994 = vsel %vm522, %v981, 0
    %996 = vmatprep.subr.mxu0 0.0
    %997 = vmatpush1.xpose.msra.mxu0 0.0
    %998 = vmatprep.subr.mxu0 0.0
    %999 = vmatpush1.xpose.msra.mxu0 0.0
    %1000 = vmatprep.subr.mxu0 0.0
    %1001 = vmatpush1.xpose.msra.mxu0 0.0
    %1002 = vmatprep.subr.mxu0 0.0
    %1003 = vmatpush1.xpose.msra.mxu0 0.0
    %1004 = vmatprep.subr.mxu0 0.0
    %1005 = vmatpush1.xpose.msra.mxu0 0.0
    %1006 = vmatprep.subr.mxu0 0.0
    %1007 = vmatpush1.xpose.msra.mxu0 0.0
    %1008 = vmatprep.subr.mxu0 0.0
    %1009 = vmatpush1.xpose.msra.mxu0 0.0
    %1010 = vmatprep.subr.mxu0 0.0
    %1011 = vmatpush1.xpose.msra.mxu0 0.0
    %1012 = vmatprep.subr.mxu0 0.0
    %1013 = vmatpush1.xpose.msra.mxu0 0.0
    %1014 = vmatprep.subr.mxu0 0.0
    %1015 = vmatpush1.xpose.msra.mxu0 0.0
    %1016 = vmatprep.subr.mxu0 0.0
    %1017 = vmatpush1.xpose.msra.mxu0 0.0
    %1018 = vmatprep.subr.mxu0 0.0
    %1019 = vmatpush1.xpose.msra.mxu0 0.0
    %1020 = vmatprep.subr.mxu0 0.0
    %1021 = vmatpush1.xpose.msra.mxu0 %v994
    %1022 = vmatprep.subr.mxu0 0.0
    %1023 = vmatpush1.xpose.msra.mxu0 %v992
    %1024 = vmatprep.subr.mxu0 0.0
    %1025 = vmatpush1.xpose.msra.mxu0 %v990
    %1026 = vmatprep.subr.mxu0 0.0
    %1027 = vmatpush1.xpose.msra.mxu0 %v988
    %1028 = vmatprep.subr.mxu0 0.0
    %1029 = vmatpush2.xpose.msra.mxu0 0.0
    %1030 = vmatprep.subr.mxu0 0.0
    %1031 = vmatpush2.xpose.msra.mxu0 0.0
    %1032 = vmatprep.subr.mxu0 0.0
    %1033 = vmatpush2.xpose.msra.mxu0 0.0
    %1034 = vmatprep.subr.mxu0 0.0
    %1035 = vmatpush2.xpose.msra.mxu0 0.0
    %1036 = vmatprep.subr.mxu0 0.0
    %1037 = vmatpush2.xpose.msra.mxu0 0.0
    %1038 = vmatprep.subr.mxu0 0.0
    %1039 = vmatpush2.xpose.msra.mxu0 0.0
    %1040 = vmatprep.subr.mxu0 0.0
    %1041 = vmatpush2.xpose.msra.mxu0 0.0
    %1042 = vmatprep.subr.mxu0 0.0
    %1043 = vmatpush2.xpose.msra.mxu0 0.0
    %1044 = vmatprep.subr.mxu0 0.0
    %1045 = vmatpush2.xpose.msra.mxu0 0.0
    %1046 = vmatprep.subr.mxu0 0.0
    %1047 = vmatpush2.xpose.msra.mxu0 0.0
    %1048 = vmatprep.subr.mxu0 0.0
    %1049 = vmatpush2.xpose.msra.mxu0 0.0
    %1050 = vmatprep.subr.mxu0 0.0
    %1051 = vmatpush2.xpose.msra.mxu0 0.0
    %1052 = vmatprep.subr.mxu0 0.0
    %1053 = vmatpush2.xpose.msra.mxu0 0.0
    %1054 = vmatprep.subr.mxu0 0.0
    %1055 = vmatpush2.xpose.msra.mxu0 0.0
    %1056 = vmatprep.subr.mxu0 0.0
    %1057 = vmatpush2.xpose.msra.mxu0 0.0
    %1058 = vmatprep.subr.mxu0 0.0
    %1059 = vmatpush2.xpose.msra.mxu0 0.0
    %1060 = vmatprep.mubr.f32.mxu0 0.0
    %1061 = vmatmul.mubr.f32.gmra.mxu0 %v983
    %v1062 = vpop.f32.mrf.mxu0
    %v1063 = vadd.f32 %v969, %v1062
    %v1064 = vpop.f32.mrf.mxu0
    %1065 = vmatprep.mubr.f32.mxu0 0.0
    %1066 = vmatmul.mubr.f32.gmra.mxu0 %v986
    %v1067 = vpop.f32.mrf.mxu0
    %v1068 = vadd.f32 %v969, %v1067
    %v1069 = vpop.f32.mrf.mxu0
    %1070 = vdwg.mxu0
    %v1071 = vadd.f32 %v1063, %v873
    %v1072 = vadd.f32 %v1068, %v874
    %v1073 = vsel %vm34, %v1071, 0.0
    %1074 = vadd.xlane.f32.xlu0 %v1073
    %v1075 = vpop.xlane.xlu0 %1074
    %v1076 = vsel %vm34, %v1072, 0.0
    %1077 = vadd.xlane.f32.xlu0 %v1076
    %v1078 = vpop.xlane.xlu0 %1077
    %v1079 = vmul.f32 %v1075, %v842
    %v1080 = vmul.f32 %v1078, %v842
    %v1081 = vsub.f32 %v1071, %v1079
    %v1082 = vsub.f32 %v1072, %v1080
    %v1083 = vmul.f32 %v1081, %v1081
    %v1084 = vmul.f32 %v1082, %v1082
    %v1085 = vsel %vm34, %v1083, 0.0
    %1086 = vadd.xlane.f32.xlu0 %v1085
    %v1087 = vpop.xlane.xlu0 %1086
    %v1088 = vsel %vm34, %v1084, 0.0
    %1089 = vadd.xlane.f32.xlu0 %v1088
    %v1090 = vpop.xlane.xlu0 %1089
    %v1091 = vmul.f32 %v1087, %v842
    %v1092 = vmul.f32 %v1090, %v842
    %v1093 = vadd.f32 %v1091, 1e-05
    %v1094 = vadd.f32 %v1092, 1e-05
    %v1095 = vrsqrt.pop %v1093
    %v1096 = vrsqrt.pop %v1094
    %v1097 = vmul.f32 %v1081, %v1095
    %v1098 = vmul.f32 %v1082, %v1096
    %v1099 = vlaneseq
    %v1100 = vshrl.u32 %v1099, 7
    %v1101 = vsub.s32 6, %v1100
    %v1102 = vrot.slane %v25, %v1101
    %v1103 = vmul.f32 %v1097, %v1102
    %v1104 = vmul.f32 %v1098, %v1102
    %v1105 = vlaneseq
    %v1106 = vshrl.u32 %v1105, 7
    %v1107 = vsub.s32 7, %v1106
    %v1108 = vrot.slane %v25, %v1107
    %v1109 = vadd.f32 %v1103, %v1108
    %v1110 = vadd.f32 %v1104, %v1108
    %1111 = vst.msk [vmem:[#allocation2] sm:$0xff] %vm34, %v1109
    %1112 = vst.msk [vmem:[#allocation2 + $0x8] sm:$0xff] %vm34, %v1110
    // Predicated region
    $region22: #{encoder_layer.1} parent=1 // pred_check
      _
    $region23: #{encoder_layer.1} parent=1 // pred_check_branch
      %1114 = sbr.rel (0) target = $region25
    $region24: #{encoder_layer.1} parent=1 // pred_region
      %s1116 = ssub.s32 256, 256
      %1117 = vsyncadd [#allocation3], %s1116
      %s1118 = sshll.u32 [#allocation2], 4
      %s1119 = int_to_ptr.vmem [resolvable:$true] %s1118
      %1124 = dma.vmem_to_hbm [thread:$0]  %s1119, 256, %s5, [#allocation3], 128, 128, 8
    $region25: #{encoder_layer.1} parent=1 // pred_fallthru
      _
    // Predicated region
    $region26: #{encoder_layer.1} parent=1 // pred_check
      _
    $region27: #{encoder_layer.1} parent=1 // pred_check_branch
      %1126 = sbr.rel (0) target = $region29
    $region28: #{encoder_layer.1} parent=1 // pred_region
      _
    $region29: #{encoder_layer.1} parent=1 // pred_fallthru
      _
    // Predicated region
    $region30: #{encoder_layer.1} parent=1 // pred_check
      _
    $region31: #{encoder_layer.1} parent=1 // pred_check_branch
      %1128 = sbr.rel (0) target = $region33
    $region32: #{encoder_layer.1} parent=1 // pred_region
      %1129 = dma.done [#allocation3], 256
    $region33: #{encoder_layer.1} parent=1 // pred_fallthru
      _
    // Predicated region
    $region34: #{encoder_layer.1} parent=1 // pred_check
      _
    $region35: #{encoder_layer.1} parent=1 // pred_check_branch
      %1131 = sbr.rel (0) target = $region37
    $region36: #{encoder_layer.1} parent=1 // pred_region
      _
    $region37: #{encoder_layer.1} parent=1 // pred_fallthru
      _
    %1132 = vsyncpa [#allocation3], 1

</llo_original>
